<compile_context>
chip_gen: v7x
topology: tpu7x:2x2x1
jax: 0.10.0
libtpu: 0.0.40
codegen_flags: <defaults>
</compile_context>

<pallas_src>
import functools

import jax
import jax.numpy as jnp
from jax.experimental import pallas as pl
from jax.experimental.pallas import tpu as pltpu


def mlp_decoder_kernel(x_ref, w1_ref, b1_ref, w2_ref, b2_ref, o_ref):
    # x_ref:  (TB, D_in)   bf16
    # w1_ref: (D_in, H)    bf16      b1_ref: (1, H)      f32
    # w2_ref: (H, D_out)   bf16      b2_ref: (1, D_out)  f32
    # o_ref:  (TB, D_out)  f32
    h = jnp.dot(x_ref[...], w1_ref[...],
                preferred_element_type=jnp.float32) + b1_ref[...]
    h = jnp.maximum(h, 0.0)                       # ReLU in f32 (v5e-friendly)
    y = jnp.dot(h.astype(w2_ref.dtype), w2_ref[...],
                preferred_element_type=jnp.float32) + b2_ref[...]
    o_ref[...] = y.astype(o_ref.dtype)


def _round_up(n, m):
    return ((n + m - 1) // m) * m


@functools.partial(jax.jit, static_argnames=("block_b",))
def mlp_decoder(x, w1, b1, w2, b2, *, block_b=512):
    """x: (B, D_in) f32/bf16; w1: (D_in, H) bf16; b1: (1, H) f32;
    w2: (H, D_out) bf16; b2: (1, D_out) f32 -> (B, D_out) f32."""
    B, D_in = x.shape
    H = w1.shape[1]
    D_out = w2.shape[1]

    # bf16 inputs to the MXU; accumulation stays f32 inside the kernel.
    x = x.astype(w1.dtype)

    # Batch tile: multiple of 8 sublanes, capped at block_b (VMEM: double-
    # buffered x/out tiles are tiny at these feature widths, well under the
    # 32 MiB scoped default on v7x).
    TB = min(block_b, _round_up(B, 8))
    B_pad = _round_up(B, TB)
    if B_pad != B:
        x = jnp.pad(x, ((0, B_pad - B), (0, 0)))

    out = pl.pallas_call(
        mlp_decoder_kernel,
        out_shape=jax.ShapeDtypeStruct((B_pad, D_out), jnp.float32),
        grid=(B_pad // TB,),
        in_specs=[
            pl.BlockSpec((TB, D_in), lambda i: (i, 0)),   # batch-tiled
            pl.BlockSpec((D_in, H), lambda i: (0, 0)),    # resident
            pl.BlockSpec((1, H), lambda i: (0, 0)),       # resident
            pl.BlockSpec((H, D_out), lambda i: (0, 0)),   # resident
            pl.BlockSpec((1, D_out), lambda i: (0, 0)),   # resident
        ],
        out_specs=pl.BlockSpec((TB, D_out), lambda i: (i, 0)),
        compiler_params=pltpu.CompilerParams(
            dimension_semantics=("parallel",)),           # 2 TCs on v7x
    )(x, w1, b1, w2, b2)

    if B_pad != B:
        out = out[:B]
    return out


def init_linear_params(key, fan_in, fan_out, *, w_dtype=jnp.bfloat16):
    # Mimic PyTorch nn.Linear default init: U(-1/sqrt(fan_in), 1/sqrt(fan_in)).
    # Weight stored transposed to (fan_in, fan_out) so the kernel does x @ W,
    # and already in bf16 (fast MXU path). Bias kept f32, pre-shaped (1, fan_out)
    # so no per-call reshape is needed.
    kw, kb = jax.random.split(key)
    bound = 1.0 / jnp.sqrt(fan_in)
    w = jax.random.uniform(kw, (fan_in, fan_out), jnp.float32, -bound, bound)
    b = jax.random.uniform(kb, (1, fan_out), jnp.float32, -bound, bound)
    return w.astype(w_dtype), b


if __name__ == "__main__":
    # Config: hidden_dim=32, latent_dim=4, latent_categories=8, obs_dim=16
    hidden_dim = 32
    latent_dim = 4
    latent_categories = 8
    obs_dim = 16
    in_dim = hidden_dim + latent_dim * latent_categories  # 64
    batch = 8

    key = jax.random.PRNGKey(0)
    k_x, k_l1, k_l2 = jax.random.split(key, 3)

    x = jax.random.normal(k_x, (batch, in_dim), jnp.float32)
    w1, b1 = init_linear_params(k_l1, in_dim, hidden_dim)
    w2, b2 = init_linear_params(k_l2, hidden_dim, obs_dim)

    out = mlp_decoder(x, w1, b1, w2, b2)
    out = jax.block_until_ready(out)

    # Reference in plain JAX with the same bf16-dot / f32-accumulate recipe.
    h_ref = jnp.dot(x.astype(jnp.bfloat16), w1,
                    preferred_element_type=jnp.float32) + b1
    h_ref = jnp.maximum(h_ref, 0.0)
    ref = jnp.dot(h_ref.astype(jnp.bfloat16), w2,
                  preferred_element_type=jnp.float32) + b2

    assert out.shape == (batch, obs_dim)
    assert out.dtype == jnp.float32
    assert jnp.allclose(out, ref, atol=1e-4, rtol=1e-4)

    print("KERNEL_OK")
</pallas_src>

<mosaic_0001>
module attributes {stable_mosaic.version = 11 : i64} {
  func.func @mlp_decoder_kernel(%arg0: i32, %arg1: memref<8x64xbf16, #tpu.memory_space<vmem>>, %arg2: memref<64x32xbf16, #tpu.memory_space<vmem>>, %arg3: memref<1x32xf32, #tpu.memory_space<vmem>>, %arg4: memref<32x16xbf16, #tpu.memory_space<vmem>>, %arg5: memref<1x16xf32, #tpu.memory_space<vmem>>, %arg6: memref<8x16xf32, #tpu.memory_space<vmem>>) attributes {dimension_semantics = [#tpu.dimension_semantics<parallel>], iteration_bounds = array<i64: 1>, scalar_prefetch = 0 : i64, scratch_operands = 0 : i64, tpu.core_type = #tpu.core_type<tc>, window_params = [{transform_indices = @transform_0, window_bounds = array<i64: 8, 64>}, {pipeline_mode = #tpu.pipeline_mode<synchronous>, transform_indices = @transform_1, window_bounds = array<i64: 64, 32>}, {pipeline_mode = #tpu.pipeline_mode<synchronous>, transform_indices = @transform_2, window_bounds = array<i64: 1, 32>}, {pipeline_mode = #tpu.pipeline_mode<synchronous>, transform_indices = @transform_3, window_bounds = array<i64: 32, 16>}, {pipeline_mode = #tpu.pipeline_mode<synchronous>, transform_indices = @transform_4, window_bounds = array<i64: 1, 16>}, {transform_indices = @transform_5, window_bounds = array<i64: 8, 16>}]} {
    %c0 = arith.constant 0 : index
    %c0_0 = arith.constant 0 : index
    %0 = vector.load %arg1[%c0, %c0_0] : memref<8x64xbf16, #tpu.memory_space<vmem>>, vector<8x64xbf16>
    %c0_1 = arith.constant 0 : index
    %c0_2 = arith.constant 0 : index
    %1 = vector.load %arg2[%c0_1, %c0_2] : memref<64x32xbf16, #tpu.memory_space<vmem>>, vector<64x32xbf16>
    %cst = arith.constant dense<0.000000e+00> : vector<8x32xf32>
    %2 = tpu.matmul %0, %1, %cst {dimension_numbers = #tpu.dot_dimension_numbers<[1], [0], [0], [1], [0, 0, 1, 1], [], []>} : vector<8x64xbf16>, vector<64x32xbf16>, vector<8x32xf32> -> vector<8x32xf32>
    %c0_3 = arith.constant 0 : index
    %c0_4 = arith.constant 0 : index
    %3 = vector.load %arg3[%c0_3, %c0_4] : memref<1x32xf32, #tpu.memory_space<vmem>>, vector<1x32xf32>
    %4 = vector.broadcast %3 : vector<1x32xf32> to vector<8x32xf32>
    %5 = arith.addf %2, %4 : vector<8x32xf32>
    %cst_5 = arith.constant 0.000000e+00 : f32
    %6 = vector.broadcast %cst_5 : f32 to vector<8x32xf32>
    %7 = arith.maximumf %5, %6 : vector<8x32xf32>
    %8 = arith.truncf %7 : vector<8x32xf32> to vector<8x32xbf16>
    %c0_6 = arith.constant 0 : index
    %c0_7 = arith.constant 0 : index
    %9 = vector.load %arg4[%c0_6, %c0_7] : memref<32x16xbf16, #tpu.memory_space<vmem>>, vector<32x16xbf16>
    %cst_8 = arith.constant dense<0.000000e+00> : vector<8x16xf32>
    %10 = tpu.matmul %8, %9, %cst_8 {dimension_numbers = #tpu.dot_dimension_numbers<[1], [0], [0], [1], [0, 0, 1, 1], [], []>} : vector<8x32xbf16>, vector<32x16xbf16>, vector<8x16xf32> -> vector<8x16xf32>
    %c0_9 = arith.constant 0 : index
    %c0_10 = arith.constant 0 : index
    %11 = vector.load %arg5[%c0_9, %c0_10] : memref<1x16xf32, #tpu.memory_space<vmem>>, vector<1x16xf32>
    %12 = vector.broadcast %11 : vector<1x16xf32> to vector<8x16xf32>
    %13 = arith.addf %10, %12 : vector<8x16xf32>
    %c0_11 = arith.constant 0 : index
    %c0_12 = arith.constant 0 : index
    %14 = vector.load %arg6[%c0_11, %c0_12] : memref<8x16xf32, #tpu.memory_space<vmem>>, vector<8x16xf32>
    tpu.vector_store %arg6[%c0_11, %c0_12], %13 {strides = array<i32>} : memref<8x16xf32, #tpu.memory_space<vmem>>, vector<8x16xf32>,
    return
  }
  func.func @transform_0(%arg0: i32) -> (i32, i32) {
    %c0_i32 = arith.constant 0 : i32
    %c0_i32_0 = arith.constant 0 : i32
    return %arg0, %c0_i32 : i32, i32
  }
  func.func @transform_1(%arg0: i32) -> (i32, i32) {
    %c0_i32 = arith.constant 0 : i32
    %c0_i32_0 = arith.constant 0 : i32
    %c0_i32_1 = arith.constant 0 : i32
    return %c0_i32, %c0_i32_0 : i32, i32
  }
  func.func @transform_2(%arg0: i32) -> (i32, i32) {
    %c0_i32 = arith.constant 0 : i32
    %c0_i32_0 = arith.constant 0 : i32
    %c0_i32_1 = arith.constant 0 : i32
    return %c0_i32, %c0_i32_0 : i32, i32
  }
  func.func @transform_3(%arg0: i32) -> (i32, i32) {
    %c0_i32 = arith.constant 0 : i32
    %c0_i32_0 = arith.constant 0 : i32
    %c0_i32_1 = arith.constant 0 : i32
    return %c0_i32, %c0_i32_0 : i32, i32
  }
  func.func @transform_4(%arg0: i32) -> (i32, i32) {
    %c0_i32 = arith.constant 0 : i32
    %c0_i32_0 = arith.constant 0 : i32
    %c0_i32_1 = arith.constant 0 : i32
    return %c0_i32, %c0_i32_0 : i32, i32
  }
  func.func @transform_5(%arg0: i32) -> (i32, i32) {
    %c0_i32 = arith.constant 0 : i32
    %c0_i32_0 = arith.constant 0 : i32
    return %arg0, %c0_i32 : i32, i32
  }
}

</mosaic_0001>

<llo_original>
// kernel: mlp_decoder.1
$region0: #{mlp_decoder.1}
  #allocation0 [shape = 'u32[]', space=smem, size = 0x4, offset = 0x4, fixed_abs, tag = 'smem constant byte address 0x4 - core index']
  #allocation1 [shape = 'u32[144,128]{1,0:T(1,128)}', space=vmem, size = 0x12000, scoped, tag = 'internal scratch']
  %s0 = inlined_call_operand.vmem [shape: bf16[8,64], index: 0, kind: input, shape index: {}]
  %s1 = inlined_call_operand.vmem [shape: bf16[64,32], index: 1, kind: input, shape index: {}]
  %s2 = inlined_call_operand.vmem [shape: f32[1,32], index: 2, kind: input, shape index: {}]
  %s3 = inlined_call_operand.vmem [shape: bf16[32,16], index: 3, kind: input, shape index: {}]
  %s4 = inlined_call_operand.vmem [shape: f32[1,16], index: 4, kind: input, shape index: {}]
  %s5 = inlined_call_operand.hbm [shape: f32[8,16], index: 5, kind: output, shape index: {}]
  %s6 = sld [smem:[#allocation0]]
  $region30: #{mlp_decoder.1} parent=0
    _
  %s8 = ssub.s32 1, %s6
  %s9 = scalar_select 0, %s8, %s6
  $region1: #{mlp_decoder.1} parent=0
    #allocation2 [shape = 'u8[4096]{0}', space=vmem, size = 0x1000, scoped, tag = 'output window, operand 0, single buffered']
    #allocation3 [shape = 's32[1]{0}', space=sflag, size = 0x4, scoped, tag = 'scoped memory for mlp_decoder.1']
    %10 = vsyncpa [#allocation3], 0
    // Predicated region
    $region2: #{mlp_decoder.1} parent=1 // pred_check
      _
    $region3: #{mlp_decoder.1} parent=1 // pred_check_branch
      %12 = sbr.rel (0) target = $region5
    $region4: #{mlp_decoder.1} parent=1 // pred_region
      _
    $region5: #{mlp_decoder.1} parent=1 // pred_fallthru
      _
    // Predicated region
    $region6: #{mlp_decoder.1} parent=1 // pred_check
      _
    $region7: #{mlp_decoder.1} parent=1 // pred_check_branch
      %14 = sbr.rel (0) target = $region9
    $region8: #{mlp_decoder.1} parent=1 // pred_region
      _
    $region9: #{mlp_decoder.1} parent=1 // pred_fallthru
      _
    // Predicated region
    $region10: #{mlp_decoder.1} parent=1 // pred_check
      _
    $region11: #{mlp_decoder.1} parent=1 // pred_check_branch
      %16 = sbr.rel (0) target = $region13
    $region12: #{mlp_decoder.1} parent=1 // pred_region
      _
    $region13: #{mlp_decoder.1} parent=1 // pred_fallthru
      _
    // Predicated region
    $region14: #{mlp_decoder.1} parent=1 // pred_check
      _
    $region15: #{mlp_decoder.1} parent=1 // pred_check_branch
      %18 = sbr.rel (0) target = $region17
    $region16: #{mlp_decoder.1} parent=1 // pred_region
      _
    $region17: #{mlp_decoder.1} parent=1 // pred_fallthru
      _
    // Predicated region
    $region18: #{mlp_decoder.1} parent=1 // pred_check
      _
    $region19: #{mlp_decoder.1} parent=1 // pred_check_branch
      %20 = sbr.rel (0) target = $region21
    $region20: #{mlp_decoder.1} parent=1 // pred_region
      _
    $region21: #{mlp_decoder.1} parent=1 // pred_fallthru
      _
    %v22 = vld [vmem:[%s0] sm:$0xf]
    %v23 = vld [vmem:[%s1] sm:$0xf]
    %v24 = vld [vmem:[%s1 + $0x4] sm:$0xf]
    %v25 = vld [vmem:[%s1 + $0x8] sm:$0xf]
    %v26 = vld [vmem:[%s1 + $0xc] sm:$0xf]
    %v27 = vld [vmem:[%s1 + $0x10] sm:$0xf]
    %v28 = vld [vmem:[%s1 + $0x14] sm:$0xf]
    %v29 = vld [vmem:[%s1 + $0x18] sm:$0xf]
    %v30 = vld [vmem:[%s1 + $0x1c] sm:$0xf]
    %v31 = vld [vmem:[%s2] sm:$0x1]
    %v33 = vlaneseq
    %v34 = vshrl.u32 %v33, 7
    %v35 = vsub.s32 0, %v34
    %v36 = vrot.slane %v31, %v35
    %v46 = vunpack.c.l.b16 %v23
    %v47 = vunpack.c.l.b16 %v24
    %v48 = vunpack.c.l.b16 %v25
    %v49 = vunpack.c.l.b16 %v26
    %v50 = vunpack.c.l.b16 %v27
    %v51 = vunpack.c.l.b16 %v28
    %v52 = vunpack.c.l.b16 %v29
    %v53 = vunpack.c.l.b16 %v30
    %v54 = vpack.c.b16 %v47, %v46
    %v55 = vpack.c.b16 %v49, %v48
    %v56 = vpack.c.b16 %v51, %v50
    %v57 = vpack.c.b16 %v53, %v52
    %vm62 = vcmask 523264
    %v64 = vsel %vm62, %v22, 0
    %66 = vmatprep.subr.bf16.mxu0 0
    %67 = vmatpush1.bf16.msra.mxu0 %v54
    %68 = vmatprep.subr.bf16.mxu0 0
    %69 = vmatpush1.bf16.msra.mxu0 %v55
    %70 = vmatprep.subr.bf16.mxu0 0
    %71 = vmatpush1.bf16.msra.mxu0 %v56
    %72 = vmatprep.subr.bf16.mxu0 0
    %73 = vmatpush1.bf16.msra.mxu0 %v57
    %74 = vmatprep.subr.bf16.mxu0 0
    %75 = vmatpush1.bf16.msra.mxu0 0
    %76 = vmatprep.subr.bf16.mxu0 0
    %77 = vmatpush1.bf16.msra.mxu0 0
    %78 = vmatprep.subr.bf16.mxu0 0
    %79 = vmatpush1.bf16.msra.mxu0 0
    %80 = vmatprep.subr.bf16.mxu0 0
    %81 = vmatpush1.bf16.msra.mxu0 0
    %82 = vmatprep.subr.bf16.mxu0 0
    %83 = vmatpush1.bf16.msra.mxu0 0
    %84 = vmatprep.subr.bf16.mxu0 0
    %85 = vmatpush1.bf16.msra.mxu0 0
    %86 = vmatprep.subr.bf16.mxu0 0
    %87 = vmatpush1.bf16.msra.mxu0 0
    %88 = vmatprep.subr.bf16.mxu0 0
    %89 = vmatpush1.bf16.msra.mxu0 0
    %90 = vmatprep.subr.bf16.mxu0 0
    %91 = vmatpush1.bf16.msra.mxu0 0
    %92 = vmatprep.subr.bf16.mxu0 0
    %93 = vmatpush1.bf16.msra.mxu0 0
    %94 = vmatprep.subr.bf16.mxu0 0
    %95 = vmatpush1.bf16.msra.mxu0 0
    %96 = vmatprep.subr.bf16.mxu0 0
    %97 = vmatpush1.bf16.msra.mxu0 0
    %98 = vmatprep.mubr.bf16.mxu0 0
    %99 = vmatmul.mubr.bf16.gmra.mrb[0].mxu0 %v64
    %v100 = vpop.f32.mrb[0].mxu0
    %v101 = vadd.f32 %v36, %v100
    %v102 = vpop.f32.mrb[0].mxu0
    %v103 = vpop.f32.mrb[0].mxu0
    %v104 = vpop.f32.mrb[0].mxu0
    %105 = vdwg.mxu0
    %v106 = vmax.f32 %v101, 0.0
    %v107 = vpack.c.bf16 %v106, %v106
    %v108 = vld [vmem:[%s3] sm:$0xf]
    %v109 = vld [vmem:[%s3 + $0x4] sm:$0xf]
    %v110 = vld [vmem:[%s3 + $0x8] sm:$0xf]
    %v111 = vld [vmem:[%s3 + $0xc] sm:$0xf]
    %v112 = vld [vmem:[%s4] sm:$0x1]
    %v114 = vlaneseq
    %v115 = vshrl.u32 %v114, 7
    %v116 = vsub.s32 0, %v115
    %v117 = vrot.slane %v112, %v116
    %v123 = vunpack.c.l.b16 %v108
    %v124 = vunpack.c.l.b16 %v109
    %v125 = vunpack.c.l.b16 %v110
    %v126 = vunpack.c.l.b16 %v111
    %v127 = vpack.c.b16 %v124, %v123
    %v128 = vpack.c.b16 %v126, %v125
    %vm131 = vcmask 261120
    %v133 = vsel %vm131, %v107, 0
    %135 = vmatprep.subr.bf16.mxu0 0
    %136 = vmatpush1.bf16.msra.mxu0 %v127
    %137 = vmatprep.subr.bf16.mxu0 0
    %138 = vmatpush1.bf16.msra.mxu0 %v128
    %139 = vmatprep.subr.bf16.mxu0 0
    %140 = vmatpush1.bf16.msra.mxu0 0
    %141 = vmatprep.subr.bf16.mxu0 0
    %142 = vmatpush1.bf16.msra.mxu0 0
    %143 = vmatprep.subr.bf16.mxu0 0
    %144 = vmatpush1.bf16.msra.mxu0 0
    %145 = vmatprep.subr.bf16.mxu0 0
    %146 = vmatpush1.bf16.msra.mxu0 0
    %147 = vmatprep.subr.bf16.mxu0 0
    %148 = vmatpush1.bf16.msra.mxu0 0
    %149 = vmatprep.subr.bf16.mxu0 0
    %150 = vmatpush1.bf16.msra.mxu0 0
    %151 = vmatprep.subr.bf16.mxu0 0
    %152 = vmatpush1.bf16.msra.mxu0 0
    %153 = vmatprep.subr.bf16.mxu0 0
    %154 = vmatpush1.bf16.msra.mxu0 0
    %155 = vmatprep.subr.bf16.mxu0 0
    %156 = vmatpush1.bf16.msra.mxu0 0
    %157 = vmatprep.subr.bf16.mxu0 0
    %158 = vmatpush1.bf16.msra.mxu0 0
    %159 = vmatprep.subr.bf16.mxu0 0
    %160 = vmatpush1.bf16.msra.mxu0 0
    %161 = vmatprep.subr.bf16.mxu0 0
    %162 = vmatpush1.bf16.msra.mxu0 0
    %163 = vmatprep.subr.bf16.mxu0 0
    %164 = vmatpush1.bf16.msra.mxu0 0
    %165 = vmatprep.subr.bf16.mxu0 0
    %166 = vmatpush1.bf16.msra.mxu0 0
    %167 = vmatprep.mubr.bf16.mxu0 0
    %168 = vmatmul.mubr.bf16.gmra.mrb[0].mxu0 %v133
    %v169 = vpop.f32.mrb[0].mxu0
    %v170 = vadd.f32 %v117, %v169
    %v171 = vpop.f32.mrb[0].mxu0
    %v172 = vpop.f32.mrb[0].mxu0
    %v173 = vpop.f32.mrb[0].mxu0
    %174 = vdwg.mxu0
    %vm175 = vcmask 130048
    %176 = vst.msk [vmem:[#allocation2] sm:$0xff] %vm175, %v170
    // Predicated region
    $region22: #{mlp_decoder.1} parent=1 // pred_check
      _
    $region23: #{mlp_decoder.1} parent=1 // pred_check_branch
      %178 = sbr.rel (0) target = $region25
    $region24: #{mlp_decoder.1} parent=1 // pred_region
      %s180 = ssub.s32 128, 128
      %181 = vsyncadd [#allocation3], %s180
      %s183 = sshll.u32 [#allocation2], 4
      %s184 = int_to_ptr.vmem [resolvable:$true] %s183
      %186 = dma.vmem_to_hbm [thread:$0]  %s184, 128, %s5, [#allocation3]
    $region25: #{mlp_decoder.1} parent=1 // pred_fallthru
      _
    // Predicated region
    $region26: #{mlp_decoder.1} parent=1 // pred_check
      _
    $region27: #{mlp_decoder.1} parent=1 // pred_check_branch
      %188 = sbr.rel (0) target = $region29
    $region28: #{mlp_decoder.1} parent=1 // pred_region
      %189 = dma.done [#allocation3], 128
    $region29: #{mlp_decoder.1} parent=1 // pred_fallthru
      _
    %190 = vsyncpa [#allocation3], 1

</llo_original>
